<compile_context>
chip_gen: v7x
topology: tpu7x:2x2x1
jax: 0.10.0
libtpu: 0.0.40
codegen_flags: <defaults>
</compile_context>

<pallas_src>
import functools

import jax
import jax.numpy as jnp
from jax.experimental import pallas as pl
from jax.experimental.pallas import tpu as pltpu

_LANE = 128  # TPU lane width: last block dims should be multiples of this


def _round_up(n, m):
    return ((n + m - 1) // m) * m


def _sublane(dtype):
    # Native second-to-last tile height: 8 rows for 32-bit, 16 for 16-bit dtypes.
    return 16 if jnp.dtype(dtype).itemsize == 2 else 8


@functools.lru_cache(maxsize=None)
def _single_buffer_supported():
    """Probe (once) whether pipeline_mode=pl.Buffered(1) is accepted by this build."""
    try:
        def _copy(x_ref, o_ref):
            o_ref[...] = x_ref[...]

        x = jnp.zeros((8, _LANE), jnp.float32)
        out = pl.pallas_call(
            _copy,
            out_shape=jax.ShapeDtypeStruct((8, _LANE), jnp.float32),
            grid=(1,),
            in_specs=[pl.BlockSpec((8, _LANE), lambda i: (0, 0),
                                   pipeline_mode=pl.Buffered(1))],
            out_specs=pl.BlockSpec((8, _LANE), lambda i: (0, 0)),
        )(x)
        jax.block_until_ready(out)
        return True
    except Exception:
        # Single-buffering knob unavailable: fall back to default double-buffering.
        return False


def mlp_kernel(x_ref, w1_ref, w2_ref, b2_ref, o_ref):
    """One batch tile of  out = (x @ W1) @ W2 + b2'   (b2' = b1 @ W2 + b2, folded offline)."""
    # fc1: (TB, D) @ (D, Hp) on the MXU, f32 accumulation.
    h = jnp.dot(x_ref[...], w1_ref[...], preferred_element_type=jnp.float32)
    # fc2: feed the MXU the weight dtype (bf16 path: f32->bf16 cast; f32 path:
    # no-op), accumulate in f32, then add the fused f32 bias.
    out = jnp.dot(h.astype(w2_ref.dtype), w2_ref[...],
                  preferred_element_type=jnp.float32)
    o_ref[...] = (out + b2_ref[...]).astype(o_ref.dtype)


def prepare_mlp_params(w1, b1, w2, b2, *, param_dtype=None):
    """One-time parameter preparation (call at init, NOT per forward).

    * Pads the lane dims (hidden H, classes C) to multiples of 128 so all
      in-kernel stores are full-lane; this HBM traffic is paid once here.
    * Folds b1 into the second-layer bias (exact: no activation in between).
    * Optionally casts weights to `param_dtype` (bf16 recommended on v6e/v7x);
      the fused bias stays f32 and is added after f32 accumulation.

    Returns (w1p, w2p, b2_fused_p, num_classes) -- pass the tuple to mlp_forward.
    """
    D, H = w1.shape
    Hin, C = w2.shape
    assert Hin == H
    b1 = jnp.asarray(b1).reshape(1, H).astype(jnp.float32)
    b2 = jnp.asarray(b2).reshape(1, C).astype(jnp.float32)
    b2_fused = b1 @ w2.astype(jnp.float32) + b2        # (1, C), exact fold in f32

    Hp = _round_up(H, _LANE)
    Cp = _round_up(C, _LANE)
    if param_dtype is not None:
        w1 = w1.astype(param_dtype)
        w2 = w2.astype(param_dtype)
    # Zero padding => padded output columns are exactly zero (sliced off later).
    w1p = jnp.pad(w1, ((0, 0), (0, Hp - H)))
    w2p = jnp.pad(w2, ((0, Hp - H), (0, Cp - C)))
    b2p = jnp.pad(b2_fused, ((0, 0), (0, Cp - C)))
    return w1p, w2p, b2p, C


def mlp_forward(x, prepared_params, *, block_b=256, vmem_limit_bytes=48 << 20):
    """Forward pass.  x: (B, D); prepared_params from prepare_mlp_params()."""
    w1p, w2p, b2p, C = prepared_params
    B, D = x.shape
    Din, Hp = w1p.shape
    Hp2, Cp = w2p.shape
    assert Din == D and Hp2 == Hp and b2p.shape == (1, Cp)

    # Both MXU operands must share a dtype: cast x to the weight dtype so a
    # bf16-weight path never promotes back to multi-pass f32 MXU matmuls.
    x = x.astype(w1p.dtype)

    sub = _sublane(x.dtype)
    # Batch tile: dtype-native sublane multiple, capped at block_b, and chosen
    # so the parallel batch grid has >= 2 (even) steps when possible -- feeds
    # both v7x TensorCores for small/medium batches.
    half_b = _round_up(-(-B // 2), sub)                 # ceil(B/2), sublane-rounded
    TB = max(sub, min(_round_up(block_b, sub), half_b))
    Bp = _round_up(B, TB)

    xp = jnp.pad(x, ((0, Bp - B), (0, 0))) if Bp != B else x

    # Resident operands (constant index_map): weights + fused bias.  Single-
    # buffer them when supported -- halves their VMEM footprint (matters for
    # v5e's 16 MiB scoped default and v7x's smaller per-TC VMEM).
    res_kw = ({"pipeline_mode": pl.Buffered(1)}
              if _single_buffer_supported() else {})

    out_p = pl.pallas_call(
        mlp_kernel,
        out_shape=jax.ShapeDtypeStruct((Bp, Cp), jnp.float32),
        grid=(Bp // TB,),
        in_specs=[
            # x: one batch tile per grid step (auto double-buffered by Pallas).
            pl.BlockSpec((TB, D), lambda i: (i, 0)),
            # Weights / fused bias: DMA'd once, VMEM-resident across all steps.
            pl.BlockSpec((D, Hp), lambda i: (0, 0), **res_kw),
            pl.BlockSpec((Hp, Cp), lambda i: (0, 0), **res_kw),
            pl.BlockSpec((1, Cp), lambda i: (0, 0), **res_kw),
        ],
        out_specs=pl.BlockSpec((TB, Cp), lambda i: (i, 0)),
        compiler_params=pltpu.CompilerParams(
            # Megacore sharding of the batch grid (v7x: 2 TCs).
            dimension_semantics=("parallel",),
            # Fit the f32 default module on v5e's 16 MiB scoped default while
            # staying under v7x's 64 MiB per-TC physical VMEM.
            vmem_limit_bytes=vmem_limit_bytes,
        ),
    )(xp, w1p, w2p, b2p)

    return out_p[:B, :C]


def init_mlp_params(key, input_feature_size, num_classes, dtype=jnp.float32):
    """Deterministic init mimicking nn.Linear default (uniform +/- 1/sqrt(fan_in))."""
    hidden = input_feature_size // 2
    k1, k2, k3, k4 = jax.random.split(key, 4)
    bound1 = 1.0 / (input_feature_size ** 0.5)
    bound2 = 1.0 / (hidden ** 0.5)
    # stored as (in, out) = transpose of torch's (out, in)
    w1 = jax.random.uniform(k1, (input_feature_size, hidden), dtype,
                            minval=-bound1, maxval=bound1)
    b1 = jax.random.uniform(k2, (1, hidden), dtype, minval=-bound1, maxval=bound1)
    w2 = jax.random.uniform(k3, (hidden, num_classes), dtype,
                            minval=-bound2, maxval=bound2)
    b2 = jax.random.uniform(k4, (1, num_classes), dtype,
                            minval=-bound2, maxval=bound2)
    return w1, b1, w2, b2


if __name__ == "__main__":
    # Small shapes consistent with the module: MLP(input_feature_size=256, num_classes=50)
    D, C = 256, 50
    key = jax.random.PRNGKey(0)
    kx, kx2, kp = jax.random.split(key, 3)
    w1, b1, w2, b2 = init_mlp_params(kp, D, C)

    # ---- f32 path, tiny batch (single grid step) ----
    B = 4
    x = jax.random.normal(kx, (B, D), jnp.float32)
    ref = (x @ w1 + b1) @ w2 + b2                      # same math as the torch module
    params_f32 = prepare_mlp_params(w1, b1, w2, b2)    # one-time prep (pads + bias fold)
    out = mlp_forward(x, params_f32)
    jax.block_until_ready(out)
    assert out.shape == (B, C)
    assert jnp.allclose(out, ref, atol=1e-4, rtol=1e-4)

    # ---- f32 path, batch that exercises a multi-step parallel grid + row padding ----
    B2 = 40
    x2 = jax.random.normal(kx2, (B2, D), jnp.float32)
    ref2 = (x2 @ w1 + b1) @ w2 + b2
    out2 = mlp_forward(x2, params_f32)
    jax.block_until_ready(out2)
    assert out2.shape == (B2, C)
    assert jnp.allclose(out2, ref2, atol=1e-4, rtol=1e-4)

    # ---- bf16-weight path (v6e/v7x recommendation): wrapper casts x to bf16 so
    #      both MXU operands are bf16; accumulation and bias add stay f32. ----
    params_bf16 = prepare_mlp_params(w1, b1, w2, b2, param_dtype=jnp.bfloat16)
    out_bf16 = mlp_forward(x, params_bf16)
    jax.block_until_ready(out_bf16)
    assert out_bf16.shape == (B, C)
    assert jnp.allclose(out_bf16, ref, atol=5e-2, rtol=5e-2)

    print("KERNEL_OK")
</pallas_src>

<mosaic_0001>
module attributes {stable_mosaic.version = 11 : i64} {
  func.func @_copy(%arg0: i32, %arg1: memref<8x128xf32, #tpu.memory_space<vmem>>, %arg2: memref<8x128xf32, #tpu.memory_space<vmem>>) attributes {dimension_semantics = [#tpu.dimension_semantics<arbitrary>], iteration_bounds = array<i64: 1>, scalar_prefetch = 0 : i64, scratch_operands = 0 : i64, tpu.core_type = #tpu.core_type<tc>, window_params = [{pipeline_mode = #tpu.pipeline_mode<synchronous>, transform_indices = @transform_0, window_bounds = array<i64: 8, 128>}, {pipeline_mode = #tpu.pipeline_mode<synchronous>, transform_indices = @transform_1, window_bounds = array<i64: 8, 128>}]} {
    %c0 = arith.constant 0 : index
    %c0_0 = arith.constant 0 : index
    %0 = vector.load %arg1[%c0, %c0_0] : memref<8x128xf32, #tpu.memory_space<vmem>>, vector<8x128xf32>
    %c0_1 = arith.constant 0 : index
    %c0_2 = arith.constant 0 : index
    %1 = vector.load %arg2[%c0_1, %c0_2] : memref<8x128xf32, #tpu.memory_space<vmem>>, vector<8x128xf32>
    tpu.vector_store %arg2[%c0_1, %c0_2], %0 {strides = array<i32>} : memref<8x128xf32, #tpu.memory_space<vmem>>, vector<8x128xf32>,
    return
  }
  func.func @transform_0(%arg0: i32) -> (i32, i32) {
    %c0_i32 = arith.constant 0 : i32
    %c0_i32_0 = arith.constant 0 : i32
    %c0_i32_1 = arith.constant 0 : i32
    return %c0_i32, %c0_i32_0 : i32, i32
  }
  func.func @transform_1(%arg0: i32) -> (i32, i32) {
    %c0_i32 = arith.constant 0 : i32
    %c0_i32_0 = arith.constant 0 : i32
    %c0_i32_1 = arith.constant 0 : i32
    return %c0_i32, %c0_i32_0 : i32, i32
  }
}

module attributes {stable_mosaic.version = 11 : i64} {
  func.func @mlp_kernel(%arg0: i32, %arg1: memref<8x256xf32, #tpu.memory_space<vmem>>, %arg2: memref<256x128xf32, #tpu.memory_space<vmem>>, %arg3: memref<128x128xf32, #tpu.memory_space<vmem>>, %arg4: memref<1x128xf32, #tpu.memory_space<vmem>>, %arg5: memref<8x128xf32, #tpu.memory_space<vmem>>) attributes {dimension_semantics = [#tpu.dimension_semantics<parallel>], iteration_bounds = array<i64: 1>, scalar_prefetch = 0 : i64, scratch_operands = 0 : i64, tpu.core_type = #tpu.core_type<tc>, window_params = [{transform_indices = @transform_0, window_bounds = array<i64: 8, 256>}, {pipeline_mode = #tpu.pipeline_mode<synchronous>, transform_indices = @transform_1, window_bounds = array<i64: 256, 128>}, {pipeline_mode = #tpu.pipeline_mode<synchronous>, transform_indices = @transform_2, window_bounds = array<i64: 128, 128>}, {pipeline_mode = #tpu.pipeline_mode<synchronous>, transform_indices = @transform_3, window_bounds = array<i64: 1, 128>}, {transform_indices = @transform_4, window_bounds = array<i64: 8, 128>}]} {
    %c0 = arith.constant 0 : index
    %c0_0 = arith.constant 0 : index
    %0 = vector.load %arg1[%c0, %c0_0] : memref<8x256xf32, #tpu.memory_space<vmem>>, vector<8x256xf32>
    %c0_1 = arith.constant 0 : index
    %c0_2 = arith.constant 0 : index
    %1 = vector.load %arg2[%c0_1, %c0_2] : memref<256x128xf32, #tpu.memory_space<vmem>>, vector<256x128xf32>
    %cst = arith.constant dense<0.000000e+00> : vector<8x128xf32>
    %2 = tpu.matmul %0, %1, %cst {dimension_numbers = #tpu.dot_dimension_numbers<[1], [0], [0], [1], [0, 0, 1, 1], [], []>} : vector<8x256xf32>, vector<256x128xf32>, vector<8x128xf32> -> vector<8x128xf32>
    %c0_3 = arith.constant 0 : index
    %c0_4 = arith.constant 0 : index
    %3 = vector.load %arg3[%c0_3, %c0_4] : memref<128x128xf32, #tpu.memory_space<vmem>>, vector<128x128xf32>
    %cst_5 = arith.constant dense<0.000000e+00> : vector<8x128xf32>
    %4 = tpu.matmul %2, %3, %cst_5 {dimension_numbers = #tpu.dot_dimension_numbers<[1], [0], [0], [1], [0, 0, 1, 1], [], []>} : vector<8x128xf32>, vector<128x128xf32>, vector<8x128xf32> -> vector<8x128xf32>
    %c0_6 = arith.constant 0 : index
    %c0_7 = arith.constant 0 : index
    %5 = vector.load %arg4[%c0_6, %c0_7] : memref<1x128xf32, #tpu.memory_space<vmem>>, vector<1x128xf32>
    %6 = vector.broadcast %5 : vector<1x128xf32> to vector<8x128xf32>
    %7 = arith.addf %4, %6 : vector<8x128xf32>
    %c0_8 = arith.constant 0 : index
    %c0_9 = arith.constant 0 : index
    %8 = vector.load %arg5[%c0_8, %c0_9] : memref<8x128xf32, #tpu.memory_space<vmem>>, vector<8x128xf32>
    tpu.vector_store %arg5[%c0_8, %c0_9], %7 {strides = array<i32>} : memref<8x128xf32, #tpu.memory_space<vmem>>, vector<8x128xf32>,
    return
  }
  func.func @transform_0(%arg0: i32) -> (i32, i32) {
    %c0_i32 = arith.constant 0 : i32
    %c0_i32_0 = arith.constant 0 : i32
    return %arg0, %c0_i32 : i32, i32
  }
  func.func @transform_1(%arg0: i32) -> (i32, i32) {
    %c0_i32 = arith.constant 0 : i32
    %c0_i32_0 = arith.constant 0 : i32
    %c0_i32_1 = arith.constant 0 : i32
    return %c0_i32, %c0_i32_0 : i32, i32
  }
  func.func @transform_2(%arg0: i32) -> (i32, i32) {
    %c0_i32 = arith.constant 0 : i32
    %c0_i32_0 = arith.constant 0 : i32
    %c0_i32_1 = arith.constant 0 : i32
    return %c0_i32, %c0_i32_0 : i32, i32
  }
  func.func @transform_3(%arg0: i32) -> (i32, i32) {
    %c0_i32 = arith.constant 0 : i32
    %c0_i32_0 = arith.constant 0 : i32
    %c0_i32_1 = arith.constant 0 : i32
    return %c0_i32, %c0_i32_0 : i32, i32
  }
  func.func @transform_4(%arg0: i32) -> (i32, i32) {
    %c0_i32 = arith.constant 0 : i32
    %c0_i32_0 = arith.constant 0 : i32
    return %arg0, %c0_i32 : i32, i32
  }
}

</mosaic_0001>

<llo_original>
// kernel: tpu_custom_call.1
$region0: #{tpu_custom_call.1}
  #allocation0 [shape = 'u32[]', space=smem, size = 0x4, offset = 0x4, fixed_abs, tag = 'smem constant byte address 0x4 - core index']
  #allocation1 [shape = 'u32[144,128]{1,0:T(1,128)}', space=vmem, size = 0x12000, scoped, tag = 'internal scratch']
  %s0 = inlined_call_operand.hbm [shape: f32[8,128], index: 0, kind: input, shape index: {}]
  %s1 = inlined_call_operand.hbm [shape: f32[8,128], index: 1, kind: output, shape index: {}]
  %s2 = sld [smem:[#allocation0]]
  $region18: #{tpu_custom_call.1} parent=0
    _
  %s4 = ssub.s32 1, %s2
  %s5 = scalar_select 0, %s4, %s2
  $region1: #{tpu_custom_call.1} parent=0
    #allocation2 [shape = 'u8[4096]{0}', space=vmem, size = 0x1000, scoped, tag = 'input window, operand 0, single buffered']
    #allocation3 [shape = 's32[1]{0}', space=sflag, size = 0x4, scoped, tag = 'scoped memory for tpu_custom_call.1']
    #allocation4 [shape = 's32[1]{0}', space=sflag, size = 0x4, scoped, tag = 'scoped memory for tpu_custom_call.1']
    #allocation5 [shape = 'u8[4096]{0}', space=vmem, size = 0x1000, scoped, tag = 'output window, operand 0, single buffered']
    %6 = vsyncpa [#allocation3], 0
    %7 = vsyncpa [#allocation4], 0
    // Predicated region
    $region2: #{tpu_custom_call.1} parent=1 // pred_check
      _
    $region3: #{tpu_custom_call.1} parent=1 // pred_check_branch
      %9 = sbr.rel (0) target = $region5
    $region4: #{tpu_custom_call.1} parent=1 // pred_region
      %s11 = ssub.s32 128, 128
      %12 = vsyncadd [#allocation3], %s11
      %s14 = sshll.u32 [#allocation2], 4
      %s15 = int_to_ptr.vmem [resolvable:$true] %s14
      %17 = dma.hbm_to_vmem [thread:$0]  %s0, 128, %s15, [#allocation3]
    $region5: #{tpu_custom_call.1} parent=1 // pred_fallthru
      _
    // Predicated region
    $region6: #{tpu_custom_call.1} parent=1 // pred_check
      _
    $region7: #{tpu_custom_call.1} parent=1 // pred_check_branch
      %19 = sbr.rel (0) target = $region9
    $region8: #{tpu_custom_call.1} parent=1 // pred_region
      %20 = dma.done [#allocation3], 128
    $region9: #{tpu_custom_call.1} parent=1 // pred_fallthru
      _
    %v21 = vld [vmem:[#allocation2] sm:$0xff]
    %22 = vst [vmem:[#allocation5] sm:$0xff] %v21
    // Predicated region
    $region10: #{tpu_custom_call.1} parent=1 // pred_check
      _
    $region11: #{tpu_custom_call.1} parent=1 // pred_check_branch
      %24 = sbr.rel (0) target = $region13
    $region12: #{tpu_custom_call.1} parent=1 // pred_region
      %s26 = ssub.s32 128, 128
      %27 = vsyncadd [#allocation4], %s26
      %s29 = sshll.u32 [#allocation5], 4
      %s30 = int_to_ptr.vmem [resolvable:$true] %s29
      %32 = dma.vmem_to_hbm [thread:$0]  %s30, 128, %s1, [#allocation4]
    $region13: #{tpu_custom_call.1} parent=1 // pred_fallthru
      _
    // Predicated region
    $region14: #{tpu_custom_call.1} parent=1 // pred_check
      _
    $region15: #{tpu_custom_call.1} parent=1 // pred_check_branch
      %34 = sbr.rel (0) target = $region17
    $region16: #{tpu_custom_call.1} parent=1 // pred_region
      %35 = dma.done [#allocation4], 128
    $region17: #{tpu_custom_call.1} parent=1 // pred_fallthru
      _
    %36 = vsyncpa [#allocation3], 1
    %37 = vsyncpa [#allocation4], 1

// kernel: tpu_custom_call.1
$region0: #{tpu_custom_call.1}
  #allocation0 [shape = 'u32[]', space=smem, size = 0x4, offset = 0x4, fixed_abs, tag = 'smem constant byte address 0x4 - core index']
  #allocation1 [shape = 'u32[144,128]{1,0:T(1,128)}', space=vmem, size = 0x12000, scoped, tag = 'internal scratch']
  %s0 = inlined_call_operand.hbm [shape: f32[8,256], index: 0, kind: input, shape index: {}]
  %s1 = inlined_call_operand.hbm [shape: f32[256,128], index: 1, kind: input, shape index: {}]
  %s2 = inlined_call_operand.hbm [shape: f32[128,128], index: 2, kind: input, shape index: {}]
  %s3 = inlined_call_operand.vmem [shape: f32[1,128], index: 3, kind: input, shape index: {}]
  %s4 = inlined_call_operand.hbm [shape: f32[8,128], index: 4, kind: output, shape index: {}]
  %s5 = sld [smem:[#allocation0]]
  $region38: #{tpu_custom_call.1} parent=0
    _
  %s7 = ssub.s32 1, %s5
  %s8 = scalar_select 0, %s7, %s5
  $region1: #{tpu_custom_call.1} parent=0
    #allocation2 [shape = 'u8[8192]{0}', space=vmem, size = 0x2000, scoped, tag = 'input window, operand 0, single buffered']
    #allocation3 [shape = 's32[1]{0}', space=sflag, size = 0x4, scoped, tag = 'scoped memory for tpu_custom_call.1']
    #allocation4 [shape = 's32[1]{0}', space=sflag, size = 0x4, scoped, tag = 'scoped memory for tpu_custom_call.1']
    #allocation5 [shape = 'u8[131072]{0}', space=vmem, size = 0x20000, scoped, tag = 'input window, operand 1, single buffered']
    #allocation6 [shape = 's32[1]{0}', space=sflag, size = 0x4, scoped, tag = 'scoped memory for tpu_custom_call.1']
    #allocation7 [shape = 'u8[65536]{0}', space=vmem, size = 0x10000, scoped, tag = 'input window, operand 2, single buffered']
    #allocation8 [shape = 'u8[4096]{0}', space=vmem, size = 0x1000, scoped, tag = 'output window, operand 0, single buffered']
    %9 = vsyncpa [#allocation3], 0
    %10 = vsyncpa [#allocation6], 0
    %11 = vsyncpa [#allocation4], 0
    // Predicated region
    $region2: #{tpu_custom_call.1} parent=1 // pred_check
      _
    $region3: #{tpu_custom_call.1} parent=1 // pred_check_branch
      %13 = sbr.rel (0) target = $region5
    $region4: #{tpu_custom_call.1} parent=1 // pred_region
      %s15 = ssub.s32 256, 256
      %16 = vsyncadd [#allocation3], %s15
      %s18 = sshll.u32 [#allocation2], 4
      %s19 = int_to_ptr.vmem [resolvable:$true] %s18
      %21 = dma.hbm_to_vmem [thread:$0]  %s0, 256, %s19, [#allocation3]
    $region5: #{tpu_custom_call.1} parent=1 // pred_fallthru
      _
    // Predicated region
    $region6: #{tpu_custom_call.1} parent=1 // pred_check
      _
    $region7: #{tpu_custom_call.1} parent=1 // pred_check_branch
      %23 = sbr.rel (0) target = $region9
    $region8: #{tpu_custom_call.1} parent=1 // pred_region
      %s25 = ssub.s32 4096, 4096
      %26 = vsyncadd [#allocation6], %s25
      %s27 = sshll.u32 [#allocation5], 4
      %s28 = int_to_ptr.vmem [resolvable:$true] %s27
      %33 = dma.hbm_to_vmem [thread:$0]  %s1, 4096, %s28, [#allocation6], 128, 128, 8
    $region9: #{tpu_custom_call.1} parent=1 // pred_fallthru
      _
    // Predicated region
    $region10: #{tpu_custom_call.1} parent=1 // pred_check
      _
    $region11: #{tpu_custom_call.1} parent=1 // pred_check_branch
      %35 = sbr.rel (0) target = $region13
    $region12: #{tpu_custom_call.1} parent=1 // pred_region
      %s37 = ssub.s32 2048, 2048
      %38 = vsyncadd [#allocation6], %s37
      %s39 = sshll.u32 [#allocation7], 4
      %s40 = int_to_ptr.vmem [resolvable:$true] %s39
      %45 = dma.hbm_to_vmem [thread:$0]  %s2, 2048, %s40, [#allocation6], 128, 128, 8
    $region13: #{tpu_custom_call.1} parent=1 // pred_fallthru
      _
    // Predicated region
    $region14: #{tpu_custom_call.1} parent=1 // pred_check
      _
    $region15: #{tpu_custom_call.1} parent=1 // pred_check_branch
      %47 = sbr.rel (0) target = $region17
    $region16: #{tpu_custom_call.1} parent=1 // pred_region
      _
    $region17: #{tpu_custom_call.1} parent=1 // pred_fallthru
      _
    // Predicated region
    $region18: #{tpu_custom_call.1} parent=1 // pred_check
      _
    $region19: #{tpu_custom_call.1} parent=1 // pred_check_branch
      %49 = sbr.rel (0) target = $region21
    $region20: #{tpu_custom_call.1} parent=1 // pred_region
      %50 = dma.done [#allocation3], 256
    $region21: #{tpu_custom_call.1} parent=1 // pred_fallthru
      _
    // Predicated region
    $region22: #{tpu_custom_call.1} parent=1 // pred_check
      _
    $region23: #{tpu_custom_call.1} parent=1 // pred_check_branch
      %52 = sbr.rel (0) target = $region25
    $region24: #{tpu_custom_call.1} parent=1 // pred_region
      %53 = dma.done [#allocation6], 4096
    $region25: #{tpu_custom_call.1} parent=1 // pred_fallthru
      _
    // Predicated region
    $region26: #{tpu_custom_call.1} parent=1 // pred_check
      _
    $region27: #{tpu_custom_call.1} parent=1 // pred_check_branch
      %55 = sbr.rel (0) target = $region29
    $region28: #{tpu_custom_call.1} parent=1 // pred_region
      %56 = dma.done [#allocation6], 2048
    $region29: #{tpu_custom_call.1} parent=1 // pred_fallthru
      _
    %v57 = vld [vmem:[#allocation2] sm:$0xff]
    %v58 = vld [vmem:[#allocation2 + $0x8] sm:$0xff]
    %v59 = vld [vmem:[#allocation5] sm:$0xff]
    %v60 = vld [vmem:[#allocation5 + $0x8] sm:$0xff]
    %v61 = vld [vmem:[#allocation5 + $0x10] sm:$0xff]
    %v62 = vld [vmem:[#allocation5 + $0x18] sm:$0xff]
    %v63 = vld [vmem:[#allocation5 + $0x20] sm:$0xff]
    %v64 = vld [vmem:[#allocation5 + $0x28] sm:$0xff]
    %v65 = vld [vmem:[#allocation5 + $0x30] sm:$0xff]
    %v66 = vld [vmem:[#allocation5 + $0x38] sm:$0xff]
    %v67 = vld [vmem:[#allocation5 + $0x40] sm:$0xff]
    %v68 = vld [vmem:[#allocation5 + $0x48] sm:$0xff]
    %v69 = vld [vmem:[#allocation5 + $0x50] sm:$0xff]
    %v70 = vld [vmem:[#allocation5 + $0x58] sm:$0xff]
    %v71 = vld [vmem:[#allocation5 + $0x60] sm:$0xff]
    %v72 = vld [vmem:[#allocation5 + $0x68] sm:$0xff]
    %v73 = vld [vmem:[#allocation5 + $0x70] sm:$0xff]
    %v74 = vld [vmem:[#allocation5 + $0x78] sm:$0xff]
    %v75 = vld [vmem:[#allocation5 + $0x80] sm:$0xff]
    %v76 = vld [vmem:[#allocation5 + $0x88] sm:$0xff]
    %v77 = vld [vmem:[#allocation5 + $0x90] sm:$0xff]
    %v78 = vld [vmem:[#allocation5 + $0x98] sm:$0xff]
    %v79 = vld [vmem:[#allocation5 + $0xa0] sm:$0xff]
    %v80 = vld [vmem:[#allocation5 + $0xa8] sm:$0xff]
    %v81 = vld [vmem:[#allocation5 + $0xb0] sm:$0xff]
    %v82 = vld [vmem:[#allocation5 + $0xb8] sm:$0xff]
    %v83 = vld [vmem:[#allocation5 + $0xc0] sm:$0xff]
    %v84 = vld [vmem:[#allocation5 + $0xc8] sm:$0xff]
    %v85 = vld [vmem:[#allocation5 + $0xd0] sm:$0xff]
    %v86 = vld [vmem:[#allocation5 + $0xd8] sm:$0xff]
    %v87 = vld [vmem:[#allocation5 + $0xe0] sm:$0xff]
    %v88 = vld [vmem:[#allocation5 + $0xe8] sm:$0xff]
    %v89 = vld [vmem:[#allocation5 + $0xf0] sm:$0xff]
    %v90 = vld [vmem:[#allocation5 + $0xf8] sm:$0xff]
    %91 = vmatprep.subr.mxu0 0.0
    %92 = vmatpush1.msra.mxu0 %v59
    %93 = vmatprep.subr.mxu0 0.0
    %94 = vmatpush1.msra.mxu0 %v60
    %95 = vmatprep.subr.mxu0 0.0
    %96 = vmatpush1.msra.mxu0 %v61
    %97 = vmatprep.subr.mxu0 0.0
    %98 = vmatpush1.msra.mxu0 %v62
    %99 = vmatprep.subr.mxu0 0.0
    %100 = vmatpush1.msra.mxu0 %v63
    %101 = vmatprep.subr.mxu0 0.0
    %102 = vmatpush1.msra.mxu0 %v64
    %103 = vmatprep.subr.mxu0 0.0
    %104 = vmatpush1.msra.mxu0 %v65
    %105 = vmatprep.subr.mxu0 0.0
    %106 = vmatpush1.msra.mxu0 %v66
    %107 = vmatprep.subr.mxu0 0.0
    %108 = vmatpush1.msra.mxu0 %v67
    %109 = vmatprep.subr.mxu0 0.0
    %110 = vmatpush1.msra.mxu0 %v68
    %111 = vmatprep.subr.mxu0 0.0
    %112 = vmatpush1.msra.mxu0 %v69
    %113 = vmatprep.subr.mxu0 0.0
    %114 = vmatpush1.msra.mxu0 %v70
    %115 = vmatprep.subr.mxu0 0.0
    %116 = vmatpush1.msra.mxu0 %v71
    %117 = vmatprep.subr.mxu0 0.0
    %118 = vmatpush1.msra.mxu0 %v72
    %119 = vmatprep.subr.mxu0 0.0
    %120 = vmatpush1.msra.mxu0 %v73
    %121 = vmatprep.subr.mxu0 0.0
    %122 = vmatpush1.msra.mxu0 %v74
    %123 = vmatprep.subr.mxu0 0.0
    %124 = vmatpush1.msra.mxu0 %v75
    %125 = vmatprep.subr.mxu0 0.0
    %126 = vmatpush1.msra.mxu0 %v76
    %127 = vmatprep.subr.mxu0 0.0
    %128 = vmatpush1.msra.mxu0 %v77
    %129 = vmatprep.subr.mxu0 0.0
    %130 = vmatpush1.msra.mxu0 %v78
    %131 = vmatprep.subr.mxu0 0.0
    %132 = vmatpush1.msra.mxu0 %v79
    %133 = vmatprep.subr.mxu0 0.0
    %134 = vmatpush1.msra.mxu0 %v80
    %135 = vmatprep.subr.mxu0 0.0
    %136 = vmatpush1.msra.mxu0 %v81
    %137 = vmatprep.subr.mxu0 0.0
    %138 = vmatpush1.msra.mxu0 %v82
    %139 = vmatprep.subr.mxu0 0.0
    %140 = vmatpush1.msra.mxu0 %v83
    %141 = vmatprep.subr.mxu0 0.0
    %142 = vmatpush1.msra.mxu0 %v84
    %143 = vmatprep.subr.mxu0 0.0
    %144 = vmatpush1.msra.mxu0 %v85
    %145 = vmatprep.subr.mxu0 0.0
    %146 = vmatpush1.msra.mxu0 %v86
    %147 = vmatprep.subr.mxu0 0.0
    %148 = vmatpush1.msra.mxu0 %v87
    %149 = vmatprep.subr.mxu0 0.0
    %150 = vmatpush1.msra.mxu0 %v88
    %151 = vmatprep.subr.mxu0 0.0
    %152 = vmatpush1.msra.mxu0 %v89
    %153 = vmatprep.subr.mxu0 0.0
    %154 = vmatpush1.msra.mxu0 %v90
    %155 = vmatprep.mubr.f32.mxu0 %v58
    %156 = vmatmul.mubr.f32.gmra.mrb[0].mxu0 %v57
    %v157 = vpop.f32.mrb[0].mxu0
    %v158 = vadd.f32 0.0, %v157
    %v159 = vpop.f32.mrb[0].mxu0
    %160 = vdwg.mxu0
    %v161 = vld [vmem:[#allocation7] sm:$0xff]
    %v162 = vld [vmem:[#allocation7 + $0x8] sm:$0xff]
    %v163 = vld [vmem:[#allocation7 + $0x10] sm:$0xff]
    %v164 = vld [vmem:[#allocation7 + $0x18] sm:$0xff]
    %v165 = vld [vmem:[#allocation7 + $0x20] sm:$0xff]
    %v166 = vld [vmem:[#allocation7 + $0x28] sm:$0xff]
    %v167 = vld [vmem:[#allocation7 + $0x30] sm:$0xff]
    %v168 = vld [vmem:[#allocation7 + $0x38] sm:$0xff]
    %v169 = vld [vmem:[#allocation7 + $0x40] sm:$0xff]
    %v170 = vld [vmem:[#allocation7 + $0x48] sm:$0xff]
    %v171 = vld [vmem:[#allocation7 + $0x50] sm:$0xff]
    %v172 = vld [vmem:[#allocation7 + $0x58] sm:$0xff]
    %v173 = vld [vmem:[#allocation7 + $0x60] sm:$0xff]
    %v174 = vld [vmem:[#allocation7 + $0x68] sm:$0xff]
    %v175 = vld [vmem:[#allocation7 + $0x70] sm:$0xff]
    %v176 = vld [vmem:[#allocation7 + $0x78] sm:$0xff]
    %v177 = vld [vmem:[%s3] sm:$0x1]
    %v179 = vlaneseq
    %v180 = vshrl.u32 %v179, 7
    %v181 = vsub.s32 0, %v180
    %v182 = vrot.slane %v177, %v181
    %184 = vmatprep.subr.mxu0 0.0
    %185 = vmatpush1.msra.mxu0 %v161
    %186 = vmatprep.subr.mxu0 0.0
    %187 = vmatpush1.msra.mxu0 %v162
    %188 = vmatprep.subr.mxu0 0.0
    %189 = vmatpush1.msra.mxu0 %v163
    %190 = vmatprep.subr.mxu0 0.0
    %191 = vmatpush1.msra.mxu0 %v164
    %192 = vmatprep.subr.mxu0 0.0
    %193 = vmatpush1.msra.mxu0 %v165
    %194 = vmatprep.subr.mxu0 0.0
    %195 = vmatpush1.msra.mxu0 %v166
    %196 = vmatprep.subr.mxu0 0.0
    %197 = vmatpush1.msra.mxu0 %v167
    %198 = vmatprep.subr.mxu0 0.0
    %199 = vmatpush1.msra.mxu0 %v168
    %200 = vmatprep.subr.mxu0 0.0
    %201 = vmatpush1.msra.mxu0 %v169
    %202 = vmatprep.subr.mxu0 0.0
    %203 = vmatpush1.msra.mxu0 %v170
    %204 = vmatprep.subr.mxu0 0.0
    %205 = vmatpush1.msra.mxu0 %v171
    %206 = vmatprep.subr.mxu0 0.0
    %207 = vmatpush1.msra.mxu0 %v172
    %208 = vmatprep.subr.mxu0 0.0
    %209 = vmatpush1.msra.mxu0 %v173
    %210 = vmatprep.subr.mxu0 0.0
    %211 = vmatpush1.msra.mxu0 %v174
    %212 = vmatprep.subr.mxu0 0.0
    %213 = vmatpush1.msra.mxu0 %v175
    %214 = vmatprep.subr.mxu0 0.0
    %215 = vmatpush1.msra.mxu0 %v176
    %216 = vmatprep.subr.mxu0 0.0
    %217 = vmatpush1.msra.mxu0 0.0
    %218 = vmatprep.subr.mxu0 0.0
    %219 = vmatpush1.msra.mxu0 0.0
    %220 = vmatprep.subr.mxu0 0.0
    %221 = vmatpush1.msra.mxu0 0.0
    %222 = vmatprep.subr.mxu0 0.0
    %223 = vmatpush1.msra.mxu0 0.0
    %224 = vmatprep.subr.mxu0 0.0
    %225 = vmatpush1.msra.mxu0 0.0
    %226 = vmatprep.subr.mxu0 0.0
    %227 = vmatpush1.msra.mxu0 0.0
    %228 = vmatprep.subr.mxu0 0.0
    %229 = vmatpush1.msra.mxu0 0.0
    %230 = vmatprep.subr.mxu0 0.0
    %231 = vmatpush1.msra.mxu0 0.0
    %232 = vmatprep.subr.mxu0 0.0
    %233 = vmatpush1.msra.mxu0 0.0
    %234 = vmatprep.subr.mxu0 0.0
    %235 = vmatpush1.msra.mxu0 0.0
    %236 = vmatprep.subr.mxu0 0.0
    %237 = vmatpush1.msra.mxu0 0.0
    %238 = vmatprep.subr.mxu0 0.0
    %239 = vmatpush1.msra.mxu0 0.0
    %240 = vmatprep.subr.mxu0 0.0
    %241 = vmatpush1.msra.mxu0 0.0
    %242 = vmatprep.subr.mxu0 0.0
    %243 = vmatpush1.msra.mxu0 0.0
    %244 = vmatprep.subr.mxu0 0.0
    %245 = vmatpush1.msra.mxu0 0.0
    %246 = vmatprep.subr.mxu0 0.0
    %247 = vmatpush1.msra.mxu0 0.0
    %248 = vmatprep.mubr.f32.mxu0 0.0
    %249 = vmatmul.mubr.f32.gmra.mrb[0].mxu0 %v158
    %v250 = vpop.f32.mrb[0].mxu0
    %v251 = vadd.f32 %v182, %v250
    %v252 = vpop.f32.mrb[0].mxu0
    %253 = vdwg.mxu0
    %254 = vst [vmem:[#allocation8] sm:$0xff] %v251
    // Predicated region
    $region30: #{tpu_custom_call.1} parent=1 // pred_check
      _
    $region31: #{tpu_custom_call.1} parent=1 // pred_check_branch
      %256 = sbr.rel (0) target = $region33
    $region32: #{tpu_custom_call.1} parent=1 // pred_region
      %s258 = ssub.s32 128, 128
      %259 = vsyncadd [#allocation4], %s258
      %s261 = sshll.u32 [#allocation8], 4
      %s262 = int_to_ptr.vmem [resolvable:$true] %s261
      %264 = dma.vmem_to_hbm [thread:$0]  %s262, 128, %s4, [#allocation4]
    $region33: #{tpu_custom_call.1} parent=1 // pred_fallthru
      _
    // Predicated region
    $region34: #{tpu_custom_call.1} parent=1 // pred_check
      _
    $region35: #{tpu_custom_call.1} parent=1 // pred_check_branch
      %266 = sbr.rel (0) target = $region37
    $region36: #{tpu_custom_call.1} parent=1 // pred_region
      %267 = dma.done [#allocation4], 128
    $region37: #{tpu_custom_call.1} parent=1 // pred_fallthru
      _
    %268 = vsyncpa [#allocation3], 1
    %269 = vsyncpa [#allocation6], 1
    %270 = vsyncpa [#allocation4], 1

</llo_original>
